<compile_context>
chip_gen: v5e
topology: v5e:2x2
jax: 0.10.0
libtpu: 0.0.40
codegen_flags: <defaults>
</compile_context>

<pallas_src>
import functools

import jax
import jax.numpy as jnp
from jax.experimental import pallas as pl
from jax.experimental.pallas import tpu as pltpu


def _round_up(x, m):
    return ((x + m - 1) // m) * m


def _make_critic_kernel(n_layers, use_bf16, batch, tile_b, mask_tail):
    """Kernel for an MLP with n_layers Linear layers.

    Ref order: (x, w_0..w_{L-1}, b_0..b_{L-1}, out)
      x    : (TILE_B, obs_dim)   contiguous obs block (no wrapper transpose)
      w_j  : (out_j, in_j)       torch-layout weight, VMEM-resident
      b_j  : (out_j, 1)          f32 bias column, VMEM-resident
      out  : (1, TILE_B)         lane-dense value row (batch on the lane axis)
    Tanh after every layer except the last (output_activation = Identity).
    """

    def kernel(*refs):
        x_ref = refs[0]
        out_ref = refs[-1]
        w_refs = refs[1:1 + n_layers]
        b_refs = refs[1 + n_layers:-1]

        x = x_ref[...]                                    # (TILE_B, obs_dim)
        if mask_tail:
            # Zero out-of-range rows of the tail block so padded garbage never
            # enters the MXU (cheap VPU select; those columns are sliced off).
            row = (jax.lax.broadcasted_iota(jnp.int32, x.shape, 0)
                   + pl.program_id(0) * tile_b)
            x = jnp.where(row < batch, x, jnp.zeros_like(x))

        h = x
        for j in range(n_layers):
            w = w_refs[j][...]
            if use_bf16 and h.dtype != jnp.bfloat16:
                h = h.astype(jnp.bfloat16)                # activations only
            if j == 0:
                # Contract the feature axis of BOTH operands: (out0, in0) x
                # (TILE_B, in0) -> (out0, TILE_B).  Batch lands on the 128-lane
                # axis without any wrapper-side transpose of obs.
                z = jax.lax.dot_general(
                    w, h, dimension_numbers=(((1,), (1,)), ((), ())),
                    preferred_element_type=jnp.float32)
            else:
                z = jnp.dot(w, h, preferred_element_type=jnp.float32)
            z = z + b_refs[j][...]                        # f32 bias, lane bcast
            h = jnp.tanh(z) if j < n_layers - 1 else z    # tanh in f32 (EUP)

        out_ref[...] = h.astype(out_ref.dtype)            # (1, TILE_B) store

    return kernel


def mlp_critic_forward(obs, weights, biases, *, tile_b=None, use_bf16=False):
    """obs: (B, obs_dim) f32 or bf16.  weights[j]: torch layout (out_j, in_j).
    biases[j]: (out_j,).  Returns value estimates of shape (B,) in f32."""
    assert len(weights) == len(biases)
    B, obs_dim = obs.shape
    n_layers = len(weights)
    assert int(weights[-1].shape[0]) == 1, "critic head must have out_dim == 1"

    # Resident operands: weights cast once on the host (bf16 on the MXU path),
    # biases as tiny f32 columns.
    w_dtype = jnp.bfloat16 if use_bf16 else jnp.float32
    ws = [jnp.asarray(w, w_dtype) for w in weights]
    bs = [jnp.asarray(b, jnp.float32).reshape(-1, 1) for b in biases]

    # Fat batch tiles to amortize the ~0.35us per-step overhead; keep >= 2
    # tiles when possible so both v7x TensorCores get a share of the grid.
    if tile_b is None:
        half = -(-B // 2)
        tile_b = max(128, min(4096, _round_up(half, 128)))
    tile_b = max(128, _round_up(int(tile_b), 128))
    num_tiles = -(-B // tile_b)               # non-divisible grid, no jnp.pad
    b_pad = num_tiles * tile_b                # padded output slab (pallas-alloc'd)
    mask_tail = (B % tile_b) != 0

    kernel = _make_critic_kernel(n_layers, use_bf16, B, tile_b, mask_tail)

    in_specs = [pl.BlockSpec((tile_b, obs_dim), lambda i: (i, 0))]
    for w in ws:                              # full-array blocks, constant index
        in_specs.append(pl.BlockSpec(w.shape, lambda i: (0, 0)))
    for b in bs:                              # -> DMA'd once, VMEM-resident
        in_specs.append(pl.BlockSpec(b.shape, lambda i: (0, 0)))
    out_spec = pl.BlockSpec((1, tile_b), lambda i: (0, i))   # lane-dense store

    # Advisory cost estimate for the surrounding XLA schedule only.
    flops = 2 * B * sum(int(w.shape[0]) * int(w.shape[1]) for w in weights)
    transcendentals = B * sum(int(w.shape[0]) for w in weights[:-1])
    bytes_accessed = (obs.size * obs.dtype.itemsize
                      + sum(w.size * w.dtype.itemsize for w in ws)
                      + sum(b.size * b.dtype.itemsize for b in bs)
                      + b_pad * 4)

    out = pl.pallas_call(
        kernel,
        out_shape=jax.ShapeDtypeStruct((1, b_pad), jnp.float32),
        grid=(num_tiles,),
        in_specs=in_specs,
        out_specs=out_spec,
        compiler_params=pltpu.CompilerParams(
            dimension_semantics=("parallel",)),
        cost_estimate=pl.CostEstimate(
            flops=flops, transcendentals=transcendentals,
            bytes_accessed=bytes_accessed),
    )(obs, *ws, *bs)

    return out[0, :B]      # == torch.squeeze(v_net(obs), -1)


def init_mlp_params(key, sizes):
    """Deterministic init matching nn.Linear's U(-1/sqrt(fan_in), 1/sqrt(fan_in)),
    stored in torch layout: W (out, in), b (out,)."""
    weights, biases = [], []
    for j in range(len(sizes) - 1):
        fan_in, fan_out = sizes[j], sizes[j + 1]
        key, kw, kb = jax.random.split(key, 3)
        bound = 1.0 / (fan_in ** 0.5)
        w = jax.random.uniform(kw, (fan_out, fan_in), jnp.float32, -bound, bound)
        b = jax.random.uniform(kb, (fan_out,), jnp.float32, -bound, bound)
        weights.append(w)
        biases.append(b)
    return weights, biases


if __name__ == "__main__":
    # Feature dims consistent with MLPCritic (spinup default hidden=(64, 64)).
    # batch=1000 is deliberately not a multiple of the tile: exercises the
    # non-divisible grid, in-kernel tail masking and a 2-tile parallel grid.
    obs_dim = 16
    hidden_sizes = (64, 64)
    batch = 1000

    key = jax.random.PRNGKey(0)
    key, k_obs = jax.random.split(key)
    obs = jax.random.normal(k_obs, (batch, obs_dim), jnp.float32)

    sizes = [obs_dim] + list(hidden_sizes) + [1]
    weights, biases = init_mlp_params(key, sizes)

    # Pure-JAX reference of the same math (torch semantics: x @ W.T + b).
    h = obs
    for j, (w, b) in enumerate(zip(weights, biases)):
        h = h @ w.T + b
        if j < len(weights) - 1:
            h = jnp.tanh(h)
    ref = jnp.squeeze(h, -1)

    # f32 path (auto tile selection).
    fwd = jax.jit(functools.partial(mlp_critic_forward))
    v = jax.block_until_ready(fwd(obs, weights, biases))
    assert v.shape == (batch,), v.shape
    assert jnp.allclose(v, ref, atol=1e-4, rtol=1e-4), float(jnp.max(jnp.abs(v - ref)))

    # bf16 MXU-operand path: weights pre-cast once, obs fed as bf16 (halves the
    # per-step obs DMA bytes); f32 accumulation / bias / tanh, looser tolerance.
    fwd_bf16 = jax.jit(functools.partial(mlp_critic_forward, use_bf16=True))
    v_bf16 = jax.block_until_ready(fwd_bf16(obs.astype(jnp.bfloat16), weights, biases))
    assert v_bf16.shape == (batch,)
    assert jnp.allclose(v_bf16, ref, atol=5e-2, rtol=5e-2), float(jnp.max(jnp.abs(v_bf16 - ref)))

    print("KERNEL_OK")
</pallas_src>

<mosaic_0001>
module attributes {stable_mosaic.version = 11 : i64} {
  func.func @kernel(%arg0: i32, %arg1: memref<512x16xf32, #tpu.memory_space<vmem>>, %arg2: memref<64x16xf32, #tpu.memory_space<vmem>>, %arg3: memref<64x64xf32, #tpu.memory_space<vmem>>, %arg4: memref<1x64xf32, #tpu.memory_space<vmem>>, %arg5: memref<64x1xf32, #tpu.memory_space<vmem>>, %arg6: memref<64x1xf32, #tpu.memory_space<vmem>>, %arg7: memref<1x1xf32, #tpu.memory_space<vmem>>, %arg8: memref<1x512xf32, #tpu.memory_space<vmem>>) attributes {dimension_semantics = [#tpu.dimension_semantics<parallel>], iteration_bounds = array<i64: 2>, scalar_prefetch = 0 : i64, scratch_operands = 0 : i64, tpu.core_type = #tpu.core_type<tc>, window_params = [{transform_indices = @transform_0, window_bounds = array<i64: 512, 16>}, {pipeline_mode = #tpu.pipeline_mode<synchronous>, transform_indices = @transform_1, window_bounds = array<i64: 64, 16>}, {pipeline_mode = #tpu.pipeline_mode<synchronous>, transform_indices = @transform_2, window_bounds = array<i64: 64, 64>}, {pipeline_mode = #tpu.pipeline_mode<synchronous>, transform_indices = @transform_3, window_bounds = array<i64: 1, 64>}, {pipeline_mode = #tpu.pipeline_mode<synchronous>, transform_indices = @transform_4, window_bounds = array<i64: 64, 1>}, {pipeline_mode = #tpu.pipeline_mode<synchronous>, transform_indices = @transform_5, window_bounds = array<i64: 64, 1>}, {pipeline_mode = #tpu.pipeline_mode<synchronous>, transform_indices = @transform_6, window_bounds = array<i64: 1, 1>}, {transform_indices = @transform_7, window_bounds = array<i64: 1, 512>}]} {
    %c0 = arith.constant 0 : index
    %c0_0 = arith.constant 0 : index
    %0 = vector.load %arg1[%c0, %c0_0] : memref<512x16xf32, #tpu.memory_space<vmem>>, vector<512x16xf32>
    %1 = tpu.iota {dimensions = array<i32: 0>} : vector<512x16xi32>
    %c512_i32 = arith.constant 512 : i32
    %2 = arith.muli %arg0, %c512_i32 : i32
    %3 = vector.broadcast %2 : i32 to vector<512x16xi32>
    %4 = arith.addi %1, %3 : vector<512x16xi32>
    %c1000_i32 = arith.constant 1000 : i32
    %5 = vector.broadcast %c1000_i32 : i32 to vector<512x16xi32>
    %6 = arith.cmpi slt, %4, %5 : vector<512x16xi32>
    %cst = arith.constant 0.000000e+00 : f32
    %7 = vector.broadcast %cst : f32 to vector<512x16xf32>
    %8 = arith.select %6, %0, %7 : vector<512x16xi1>, vector<512x16xf32>
    %c0_1 = arith.constant 0 : index
    %c0_2 = arith.constant 0 : index
    %9 = vector.load %arg2[%c0_1, %c0_2] : memref<64x16xf32, #tpu.memory_space<vmem>>, vector<64x16xf32>
    %cst_3 = arith.constant dense<0.000000e+00> : vector<64x512xf32>
    %10 = tpu.matmul %9, %8, %cst_3 {dimension_numbers = #tpu.dot_dimension_numbers<[1], [1], [0], [0], [0, 0, 1, 0], [], []>} : vector<64x16xf32>, vector<512x16xf32>, vector<64x512xf32> -> vector<64x512xf32>
    %c0_4 = arith.constant 0 : index
    %c0_5 = arith.constant 0 : index
    %11 = vector.load %arg5[%c0_4, %c0_5] : memref<64x1xf32, #tpu.memory_space<vmem>>, vector<64x1xf32>
    %12 = vector.broadcast %11 : vector<64x1xf32> to vector<64x512xf32>
    %13 = arith.addf %10, %12 : vector<64x512xf32>
    %14 = math.tanh %13 : vector<64x512xf32>
    %c0_6 = arith.constant 0 : index
    %c0_7 = arith.constant 0 : index
    %15 = vector.load %arg3[%c0_6, %c0_7] : memref<64x64xf32, #tpu.memory_space<vmem>>, vector<64x64xf32>
    %cst_8 = arith.constant dense<0.000000e+00> : vector<64x512xf32>
    %16 = tpu.matmul %15, %14, %cst_8 {dimension_numbers = #tpu.dot_dimension_numbers<[1], [0], [0], [1], [0, 0, 1, 1], [], []>} : vector<64x64xf32>, vector<64x512xf32>, vector<64x512xf32> -> vector<64x512xf32>
    %c0_9 = arith.constant 0 : index
    %c0_10 = arith.constant 0 : index
    %17 = vector.load %arg6[%c0_9, %c0_10] : memref<64x1xf32, #tpu.memory_space<vmem>>, vector<64x1xf32>
    %18 = vector.broadcast %17 : vector<64x1xf32> to vector<64x512xf32>
    %19 = arith.addf %16, %18 : vector<64x512xf32>
    %20 = math.tanh %19 : vector<64x512xf32>
    %c0_11 = arith.constant 0 : index
    %c0_12 = arith.constant 0 : index
    %21 = vector.load %arg4[%c0_11, %c0_12] : memref<1x64xf32, #tpu.memory_space<vmem>>, vector<1x64xf32>
    %cst_13 = arith.constant dense<0.000000e+00> : vector<1x512xf32>
    %22 = tpu.matmul %21, %20, %cst_13 {dimension_numbers = #tpu.dot_dimension_numbers<[1], [0], [0], [1], [0, 0, 1, 1], [], []>} : vector<1x64xf32>, vector<64x512xf32>, vector<1x512xf32> -> vector<1x512xf32>
    %c0_14 = arith.constant 0 : index
    %c0_15 = arith.constant 0 : index
    %23 = vector.load %arg7[%c0_14, %c0_15] : memref<1x1xf32, #tpu.memory_space<vmem>>, vector<1x1xf32>
    %24 = vector.broadcast %23 : vector<1x1xf32> to vector<1x512xf32>
    %25 = arith.addf %22, %24 : vector<1x512xf32>
    %c0_16 = arith.constant 0 : index
    %c0_17 = arith.constant 0 : index
    %26 = vector.load %arg8[%c0_16, %c0_17] : memref<1x512xf32, #tpu.memory_space<vmem>>, vector<1x512xf32>
    tpu.vector_store %arg8[%c0_16, %c0_17], %25 {strides = array<i32>} : memref<1x512xf32, #tpu.memory_space<vmem>>, vector<1x512xf32>,
    return
  }
  func.func @transform_0(%arg0: i32) -> (i32, i32) {
    %c0_i32 = arith.constant 0 : i32
    %c0_i32_0 = arith.constant 0 : i32
    return %arg0, %c0_i32 : i32, i32
  }
  func.func @transform_1(%arg0: i32) -> (i32, i32) {
    %c0_i32 = arith.constant 0 : i32
    %c0_i32_0 = arith.constant 0 : i32
    %c0_i32_1 = arith.constant 0 : i32
    return %c0_i32, %c0_i32_0 : i32, i32
  }
  func.func @transform_2(%arg0: i32) -> (i32, i32) {
    %c0_i32 = arith.constant 0 : i32
    %c0_i32_0 = arith.constant 0 : i32
    %c0_i32_1 = arith.constant 0 : i32
    return %c0_i32, %c0_i32_0 : i32, i32
  }
  func.func @transform_3(%arg0: i32) -> (i32, i32) {
    %c0_i32 = arith.constant 0 : i32
    %c0_i32_0 = arith.constant 0 : i32
    %c0_i32_1 = arith.constant 0 : i32
    return %c0_i32, %c0_i32_0 : i32, i32
  }
  func.func @transform_4(%arg0: i32) -> (i32, i32) {
    %c0_i32 = arith.constant 0 : i32
    %c0_i32_0 = arith.constant 0 : i32
    %c0_i32_1 = arith.constant 0 : i32
    return %c0_i32, %c0_i32_0 : i32, i32
  }
  func.func @transform_5(%arg0: i32) -> (i32, i32) {
    %c0_i32 = arith.constant 0 : i32
    %c0_i32_0 = arith.constant 0 : i32
    %c0_i32_1 = arith.constant 0 : i32
    return %c0_i32, %c0_i32_0 : i32, i32
  }
  func.func @transform_6(%arg0: i32) -> (i32, i32) {
    %c0_i32 = arith.constant 0 : i32
    %c0_i32_0 = arith.constant 0 : i32
    %c0_i32_1 = arith.constant 0 : i32
    return %c0_i32, %c0_i32_0 : i32, i32
  }
  func.func @transform_7(%arg0: i32) -> (i32, i32) {
    %c0_i32 = arith.constant 0 : i32
    %c0_i32_0 = arith.constant 0 : i32
    return %c0_i32, %arg0 : i32, i32
  }
}

</mosaic_0001>

<llo_original>
// kernel: mlp_critic_forward.1
$region0: #{mlp_critic_forward.1}
  #allocation0 [shape = 'u32[]', space=smem, size = 0x4, offset = 0x4, fixed_abs, tag = 'smem constant byte address 0x4 - core index']
  #allocation1 [shape = 'u32[72,128]{1,0:T(1,128)}', space=vmem, size = 0x9000, scoped, tag = 'internal scratch']
  #allocation2 [shape = 'f32[1,1]{1,0:T(1,128)S(1)}', space=vmem, size = 0x200, scoped, tag = 'scoped memory for mlp_critic_forward.1']
  %s0 = inlined_call_operand.vmem [shape: f32[1000,16], index: 0, kind: input, shape index: {}]
  %s1 = inlined_call_operand.vmem [shape: f32[64,16], index: 1, kind: input, shape index: {}]
  %s2 = inlined_call_operand.vmem [shape: f32[64,64], index: 2, kind: input, shape index: {}]
  %s3 = inlined_call_operand.vmem [shape: f32[1,64], index: 3, kind: input, shape index: {}]
  %s4 = inlined_call_operand.vmem [shape: f32[64,1], index: 4, kind: input, shape index: {}]
  %s5 = inlined_call_operand.vmem [shape: f32[64,1], index: 5, kind: input, shape index: {}]
  %s6 = inlined_call_operand.<no memory space> [shape: f32[1,1], index: 6, kind: input, shape index: {}]
  %s7 = inlined_call_operand.hbm [shape: f32[1,1024], index: 7, kind: output, shape index: {}]
  %s8 = sld [smem:[#allocation0]]
  $region61: #{mlp_critic_forward.1} parent=0
    _
  %s10 = ssub.s32 1, %s8
  %s11 = scalar_select 0, %s10, %s8
  %v12 = vstv %s6
  %13 = vst [vmem:[#allocation2] sm:$0x1] %v12
  $region1: #{mlp_critic_forward.1} parent=0
    #allocation3 [shape = 'u8[4096]{0}', space=vmem, size = 0x1000, scoped, tag = 'output window, operand 0']
    #allocation4 [shape = 's32[2]{0}', space=sflag, size = 0x8, scoped, tag = 'scoped memory for mlp_critic_forward.1']
    %14 = vsyncpa [#allocation4], 0
    %s15 = scalar_lea.sflag [#allocation4], 1
    %16 = vsyncpa %s15, 0
    loop: start=0, step=1, limit=4
    $region2: #{mlp_critic_forward.1} parent=1 // loop_pre_header
      _
    $region3: #{mlp_critic_forward.1} parent=1 // loop_header
      %s18 = sphi 0, %s22
      %p19 = scmp.ge.s32.totalorder %s18, 4
      %s28 = sphi 0, %s30
      %s31 = sphi 0, %s28
      %s32 = sphi 0, %s31
      %s48 = sphi 0, %s32
      %s52 = sphi 0, %s52
      %s54 = sphi 0, %s52
      %s55 = sphi 0, %s54
      %s69 = sphi 0, %s55
      %s73 = sphi 0, %s73
      %s75 = sphi 0, %s73
      %s76 = sphi 0, %s75
      %s90 = sphi 0, %s76
      %s94 = sphi 0, %s94
      %s96 = sphi 0, %s94
      %s97 = sphi 0, %s96
      %s111 = sphi 0, %s97
      %s115 = sphi 0, %s115
      %s117 = sphi 0, %s115
      %s118 = sphi 0, %s117
      %s132 = sphi 0, %s118
      %s136 = sphi 0, %s136
      %s138 = sphi 0, %s136
      %s139 = sphi 0, %s138
      %s153 = sphi 0, %s139
      %s157 = sphi 0, %s157
      %s159 = sphi 0, %s157
      %s160 = sphi 0, %s159
      %s174 = sphi 0, %s160
      %s180 = sphi 0, %s182
      %s183 = sphi 0, %s180
      %s184 = sphi 0, %s183
      %s200 = sphi 0, %s184
    $region4: #{mlp_critic_forward.1} parent=1 // loop_header_branch
      %21 = sbr.rel (%p19) target = $region8
    $region5: #{mlp_critic_forward.1} parent=1 // loop_body
      %s23 = ssub.s32 %s18, 1
      %s24 = ssub.s32 %s18, 2
      %s25 = sadd.s32 %s18, 1
      %s26 = ssub.s32 %s18, %s25
      %p27 = scmp.eq.s32.totalorder %s26, 0
      %s29 = sadd.s32 %s28, 1
      %s30 = scalar_select %p27, %s28, %s29
      %p33 = pneg %p27
      %p34 = scmp.eq.s32.totalorder %s18, 1
      %p35 = por %p33, %p34
      %p36 = scmp.ne.s32.totalorder %s28, %s31
      %p37 = scmp.eq.s32.totalorder %s18, 0
      %p38 = por %p36, %p37
      %p39 = scmp.ne.s32.totalorder %s28, %s31
      %p40 = scmp.eq.s32.totalorder %s23, 1
      %p41 = por %p39, %p40
      %p42 = scmp.ne.s32.totalorder %s31, %s32
      %p43 = scmp.eq.s32.totalorder %s23, 0
      %p44 = por %p42, %p43
      %p45 = scmp.ne.s32.totalorder %s31, %s32
      %p46 = scmp.eq.s32.totalorder %s24, 1
      %p47 = por %p45, %p46
      %p49 = scmp.ne.s32.totalorder %s32, %s48
      %p50 = scmp.eq.s32.totalorder %s24, 0
      %p51 = por %p49, %p50
      %s53 = sadd.s32 %s52, 1
      %p56 = scmp.eq.s32.totalorder %s18, 1
      %p57 = scmp.ne.s32.totalorder %s52, %s54
      %p58 = scmp.eq.s32.totalorder %s18, 0
      %p59 = por %p57, %p58
      %p60 = scmp.ne.s32.totalorder %s52, %s54
      %p61 = scmp.eq.s32.totalorder %s23, 1
      %p62 = por %p60, %p61
      %p63 = scmp.ne.s32.totalorder %s54, %s55
      %p64 = scmp.eq.s32.totalorder %s23, 0
      %p65 = por %p63, %p64
      %p66 = scmp.ne.s32.totalorder %s54, %s55
      %p67 = scmp.eq.s32.totalorder %s24, 1
      %p68 = por %p66, %p67
      %p70 = scmp.ne.s32.totalorder %s55, %s69
      %p71 = scmp.eq.s32.totalorder %s24, 0
      %p72 = por %p70, %p71
      %s74 = sadd.s32 %s73, 1
      %p77 = scmp.eq.s32.totalorder %s18, 1
      %p78 = scmp.ne.s32.totalorder %s73, %s75
      %p79 = scmp.eq.s32.totalorder %s18, 0
      %p80 = por %p78, %p79
      %p81 = scmp.ne.s32.totalorder %s73, %s75
      %p82 = scmp.eq.s32.totalorder %s23, 1
      %p83 = por %p81, %p82
      %p84 = scmp.ne.s32.totalorder %s75, %s76
      %p85 = scmp.eq.s32.totalorder %s23, 0
      %p86 = por %p84, %p85
      %p87 = scmp.ne.s32.totalorder %s75, %s76
      %p88 = scmp.eq.s32.totalorder %s24, 1
      %p89 = por %p87, %p88
      %p91 = scmp.ne.s32.totalorder %s76, %s90
      %p92 = scmp.eq.s32.totalorder %s24, 0
      %p93 = por %p91, %p92
      %s95 = sadd.s32 %s94, 1
      %p98 = scmp.eq.s32.totalorder %s18, 1
      %p99 = scmp.ne.s32.totalorder %s94, %s96
      %p100 = scmp.eq.s32.totalorder %s18, 0
      %p101 = por %p99, %p100
      %p102 = scmp.ne.s32.totalorder %s94, %s96
      %p103 = scmp.eq.s32.totalorder %s23, 1
      %p104 = por %p102, %p103
      %p105 = scmp.ne.s32.totalorder %s96, %s97
      %p106 = scmp.eq.s32.totalorder %s23, 0
      %p107 = por %p105, %p106
      %p108 = scmp.ne.s32.totalorder %s96, %s97
      %p109 = scmp.eq.s32.totalorder %s24, 1
      %p110 = por %p108, %p109
      %p112 = scmp.ne.s32.totalorder %s97, %s111
      %p113 = scmp.eq.s32.totalorder %s24, 0
      %p114 = por %p112, %p113
      %s116 = sadd.s32 %s115, 1
      %p119 = scmp.eq.s32.totalorder %s18, 1
      %p120 = scmp.ne.s32.totalorder %s115, %s117
      %p121 = scmp.eq.s32.totalorder %s18, 0
      %p122 = por %p120, %p121
      %p123 = scmp.ne.s32.totalorder %s115, %s117
      %p124 = scmp.eq.s32.totalorder %s23, 1
      %p125 = por %p123, %p124
      %p126 = scmp.ne.s32.totalorder %s117, %s118
      %p127 = scmp.eq.s32.totalorder %s23, 0
      %p128 = por %p126, %p127
      %p129 = scmp.ne.s32.totalorder %s117, %s118
      %p130 = scmp.eq.s32.totalorder %s24, 1
      %p131 = por %p129, %p130
      %p133 = scmp.ne.s32.totalorder %s118, %s132
      %p134 = scmp.eq.s32.totalorder %s24, 0
      %p135 = por %p133, %p134
      %s137 = sadd.s32 %s136, 1
      %p140 = scmp.eq.s32.totalorder %s18, 1
      %p141 = scmp.ne.s32.totalorder %s136, %s138
      %p142 = scmp.eq.s32.totalorder %s18, 0
      %p143 = por %p141, %p142
      %p144 = scmp.ne.s32.totalorder %s136, %s138
      %p145 = scmp.eq.s32.totalorder %s23, 1
      %p146 = por %p144, %p145
      %p147 = scmp.ne.s32.totalorder %s138, %s139
      %p148 = scmp.eq.s32.totalorder %s23, 0
      %p149 = por %p147, %p148
      %p150 = scmp.ne.s32.totalorder %s138, %s139
      %p151 = scmp.eq.s32.totalorder %s24, 1
      %p152 = por %p150, %p151
      %p154 = scmp.ne.s32.totalorder %s139, %s153
      %p155 = scmp.eq.s32.totalorder %s24, 0
      %p156 = por %p154, %p155
      %s158 = sadd.s32 %s157, 1
      %p161 = scmp.eq.s32.totalorder %s18, 1
      %p162 = scmp.ne.s32.totalorder %s157, %s159
      %p163 = scmp.eq.s32.totalorder %s18, 0
      %p164 = por %p162, %p163
      %p165 = scmp.ne.s32.totalorder %s157, %s159
      %p166 = scmp.eq.s32.totalorder %s23, 1
      %p167 = por %p165, %p166
      %p168 = scmp.ne.s32.totalorder %s159, %s160
      %p169 = scmp.eq.s32.totalorder %s23, 0
      %p170 = por %p168, %p169
      %p171 = scmp.ne.s32.totalorder %s159, %s160
      %p172 = scmp.eq.s32.totalorder %s24, 1
      %p173 = por %p171, %p172
      %p175 = scmp.ne.s32.totalorder %s160, %s174
      %p176 = scmp.eq.s32.totalorder %s24, 0
      %p177 = por %p175, %p176
      %s178 = ssub.s32 %s18, %s25
      %p179 = scmp.eq.s32.totalorder %s178, 0
      %s181 = sadd.s32 %s180, 1
      %s182 = scalar_select %p179, %s180, %s181
      %p185 = pneg %p179
      %p186 = scmp.eq.s32.totalorder %s18, 1
      %p187 = por %p185, %p186
      %p188 = scmp.ne.s32.totalorder %s180, %s183
      %p189 = scmp.eq.s32.totalorder %s18, 0
      %p190 = por %p188, %p189
      %p191 = scmp.ne.s32.totalorder %s180, %s183
      %p192 = scmp.eq.s32.totalorder %s23, 1
      %p193 = por %p191, %p192
      %p194 = scmp.ne.s32.totalorder %s183, %s184
      %p195 = scmp.eq.s32.totalorder %s23, 0
      %p196 = por %p194, %p195
      %p197 = scmp.ne.s32.totalorder %s183, %s184
      %p198 = scmp.eq.s32.totalorder %s24, 1
      %p199 = por %p197, %p198
      %p201 = scmp.ne.s32.totalorder %s184, %s200
      %p202 = scmp.eq.s32.totalorder %s24, 0
      %p203 = por %p201, %p202
      %p204 = scmp.le.s32.totalorder 1, %s18
      %p205 = scmp.lt.s32.totalorder %s18, 3
      %p206 = pnand %p204, %p205
      %p207 = pneg %p206
      // Predicated region
      $region9: #{mlp_critic_forward.1} parent=5 // pred_check
        _
      $region10: #{mlp_critic_forward.1} parent=5 // pred_check_branch
        %209 = sbr.rel (%p206) target = $region12
      $region11: #{mlp_critic_forward.1} parent=5 // pred_region
        %s210 = ssub.s32 %s18, 1
        // Predicated region
        $region13: #{mlp_critic_forward.1} parent=11 // pred_check
          %p211 = pneg %p65
        $region14: #{mlp_critic_forward.1} parent=11 // pred_check_branch
          %213 = sbr.rel (%p211) target = $region16
        $region15: #{mlp_critic_forward.1} parent=11 // pred_region
          _
        $region16: #{mlp_critic_forward.1} parent=11 // pred_fallthru
          _
        // Predicated region
        $region17: #{mlp_critic_forward.1} parent=11 // pred_check
          %p214 = pneg %p86
        $region18: #{mlp_critic_forward.1} parent=11 // pred_check_branch
          %216 = sbr.rel (%p214) target = $region20
        $region19: #{mlp_critic_forward.1} parent=11 // pred_region
          _
        $region20: #{mlp_critic_forward.1} parent=11 // pred_fallthru
          _
        // Predicated region
        $region21: #{mlp_critic_forward.1} parent=11 // pred_check
          %p217 = pneg %p107
        $region22: #{mlp_critic_forward.1} parent=11 // pred_check_branch
          %219 = sbr.rel (%p217) target = $region24
        $region23: #{mlp_critic_forward.1} parent=11 // pred_region
          _
        $region24: #{mlp_critic_forward.1} parent=11 // pred_fallthru
          _
        // Predicated region
        $region25: #{mlp_critic_forward.1} parent=11 // pred_check
          %p220 = pneg %p128
        $region26: #{mlp_critic_forward.1} parent=11 // pred_check_branch
          %222 = sbr.rel (%p220) target = $region28
        $region27: #{mlp_critic_forward.1} parent=11 // pred_region
          _
        $region28: #{mlp_critic_forward.1} parent=11 // pred_fallthru
          _
        // Predicated region
        $region29: #{mlp_critic_forward.1} parent=11 // pred_check
          %p223 = pneg %p149
        $region30: #{mlp_critic_forward.1} parent=11 // pred_check_branch
          %225 = sbr.rel (%p223) target = $region32
        $region31: #{mlp_critic_forward.1} parent=11 // pred_region
          _
        $region32: #{mlp_critic_forward.1} parent=11 // pred_fallthru
          _
        // Predicated region
        $region33: #{mlp_critic_forward.1} parent=11 // pred_check
          %p226 = pneg %p170
        $region34: #{mlp_critic_forward.1} parent=11 // pred_check_branch
          %228 = sbr.rel (%p226) target = $region36
        $region35: #{mlp_critic_forward.1} parent=11 // pred_region
          _
        $region36: #{mlp_critic_forward.1} parent=11 // pred_fallthru
          _
      $region12: #{mlp_critic_forward.1} parent=5 // pred_fallthru
        _
      %p229 = scmp.lt.s32.totalorder %s18, 2
      // Predicated region
      $region37: #{mlp_critic_forward.1} parent=5 // pred_check
        %p230 = pneg %p229
      $region38: #{mlp_critic_forward.1} parent=5 // pred_check_branch
        %232 = sbr.rel (%p230) target = $region40
      $region39: #{mlp_critic_forward.1} parent=5 // pred_region
        // Predicated region
        $region41: #{mlp_critic_forward.1} parent=39 // pred_check
          %p233 = pneg %p38
        $region42: #{mlp_critic_forward.1} parent=39 // pred_check_branch
          %235 = sbr.rel (%p233) target = $region44
        $region43: #{mlp_critic_forward.1} parent=39 // pred_region
          %s236 = smul.u32 64, %s18
          %s237 = ssub.s32 125, %s236
          %p238 = scmp.lt.s32.totalorder %s237, 64
          %s239 = scalar_select %p238, %s237, 64
          %s240 = smul.u32 8, %s239
          %p241 = scmp.lt.s32.totalorder %s236, 124
          %s242 = scalar_select %p241, %s236, 124
          %s243 = smul.addr %s242, 8
          %s244 = scalar_lea.vmem %s0, %s243
          %s245 = smul.u32 64, %s18
          %s246 = ssub.s32 125, %s245
          %p247 = scmp.lt.s32.totalorder %s246, 64
          %s248 = scalar_select %p247, %s246, 64
          %s249 = smul.u32 8, %s248
        $region44: #{mlp_critic_forward.1} parent=39 // pred_fallthru
          _
      $region40: #{mlp_critic_forward.1} parent=5 // pred_fallthru
        _
      %p250 = scmp.le.s32.totalorder 1, %s18
      %p251 = scmp.lt.s32.totalorder %s18, 3
      %p252 = pnand %p250, %p251
      %p253 = pneg %p252
      // Predicated region
      $region45: #{mlp_critic_forward.1} parent=5 // pred_check
        _
      $region46: #{mlp_critic_forward.1} parent=5 // pred_check_branch
        %255 = sbr.rel (%p252) target = $region48
      $region47: #{mlp_critic_forward.1} parent=5 // pred_region
        %s256 = ssub.s32 %s18, 1
        %s257 = smul.u32 64, %s23
        %s258 = ssub.s32 125, %s257
        %p259 = scmp.lt.s32.totalorder %s258, 64
        %s260 = scalar_select %p259, %s258, 64
        %s261 = smul.u32 8, %s260
        %p262 = scmp.lt.s32.totalorder %s257, 124
        %s263 = scalar_select %p262, %s257, 124
        %s264 = smul.addr %s263, 8
        %s265 = scalar_lea.vmem %s0, %s264
        %p266 = pneg %p44
        %p267 = pneg %p41
        %p268 = pneg %p65
        %p269 = pneg %p62
        %p270 = pneg %p86
        %p271 = pneg %p83
        %p272 = pneg %p107
        %p273 = pneg %p104
        %p274 = pneg %p128
        %p275 = pneg %p125
        %p276 = pneg %p149
        %p277 = pneg %p146
        %p278 = pneg %p170
        %p279 = pneg %p167
        %p280 = pneg %p196
        %p281 = pneg %p193
        %s282 = sand.u32 %s183, 1
        %s283 = scalar_lea.sflag [#allocation4], %s282
        %s284 = sand.u32 %s183, 1
        %s285 = smul.addr %s284, 4
        %s286 = scalar_lea.vmem [#allocation3], %s285
        %s287 = smul.u32 64, %s23
        %s288 = ssub.s32 125, %s287
        %p289 = scmp.lt.s32.totalorder %s288, 64
        %s290 = scalar_select %p289, %s288, 64
        %s291 = smul.u32 8, %s290
        %p292 = scmp.lt.s32.totalorder %s287, 124
        %s293 = scalar_select %p292, %s287, 124
        %s294 = smul.addr %s293, 8
        %s295 = scalar_lea.vmem %s0, %s294
        %s296 = smul.u32 64, %s23
        %s297 = ssub.s32 125, %s296
        %p298 = scmp.lt.s32.totalorder %s297, 64
        %s299 = scalar_select %p298, %s297, 64
        %s300 = smul.u32 8, %s299
        %s301 = smul.u32 4, %s23
        %v302 = vld [vmem:[%s295] sm:$0xff]
        %v303 = vld [vmem:[%s295 + $0x8] sm:$0xff]
        %v304 = vld [vmem:[%s295 + $0x10] sm:$0xff]
        %v305 = vld [vmem:[%s295 + $0x18] sm:$0xff]
        %v306 = vld [vmem:[%s295 + $0x20] sm:$0xff]
        %v307 = vld [vmem:[%s295 + $0x28] sm:$0xff]
        %v308 = vld [vmem:[%s295 + $0x30] sm:$0xff]
        %v309 = vld [vmem:[%s295 + $0x38] sm:$0xff]
        %v310 = vld [vmem:[%s295 + $0x40] sm:$0xff]
        %v311 = vld [vmem:[%s295 + $0x48] sm:$0xff]
        %v312 = vld [vmem:[%s295 + $0x50] sm:$0xff]
        %v313 = vld [vmem:[%s295 + $0x58] sm:$0xff]
        %v314 = vld [vmem:[%s295 + $0x60] sm:$0xff]
        %v315 = vld [vmem:[%s295 + $0x68] sm:$0xff]
        %v316 = vld [vmem:[%s295 + $0x70] sm:$0xff]
        %v317 = vld [vmem:[%s295 + $0x78] sm:$0xff]
        %v318 = vld [vmem:[%s295 + $0x80] sm:$0xff]
        %v319 = vld [vmem:[%s295 + $0x88] sm:$0xff]
        %v320 = vld [vmem:[%s295 + $0x90] sm:$0xff]
        %v321 = vld [vmem:[%s295 + $0x98] sm:$0xff]
        %v322 = vld [vmem:[%s295 + $0xa0] sm:$0xff]
        %v323 = vld [vmem:[%s295 + $0xa8] sm:$0xff]
        %v324 = vld [vmem:[%s295 + $0xb0] sm:$0xff]
        %v325 = vld [vmem:[%s295 + $0xb8] sm:$0xff]
        %v326 = vld [vmem:[%s295 + $0xc0] sm:$0xff]
        %v327 = vld [vmem:[%s295 + $0xc8] sm:$0xff]
        %v328 = vld [vmem:[%s295 + $0xd0] sm:$0xff]
        %v329 = vld [vmem:[%s295 + $0xd8] sm:$0xff]
        %v330 = vld [vmem:[%s295 + $0xe0] sm:$0xff]
        %v331 = vld [vmem:[%s295 + $0xe8] sm:$0xff]
        %v332 = vld [vmem:[%s295 + $0xf0] sm:$0xff]
        %v333 = vld [vmem:[%s295 + $0xf8] sm:$0xff]
        %v334 = vld [vmem:[%s295 + $0x100] sm:$0xff]
        %v335 = vld [vmem:[%s295 + $0x108] sm:$0xff]
        %v336 = vld [vmem:[%s295 + $0x110] sm:$0xff]
        %v337 = vld [vmem:[%s295 + $0x118] sm:$0xff]
        %v338 = vld [vmem:[%s295 + $0x120] sm:$0xff]
        %v339 = vld [vmem:[%s295 + $0x128] sm:$0xff]
        %v340 = vld [vmem:[%s295 + $0x130] sm:$0xff]
        %v341 = vld [vmem:[%s295 + $0x138] sm:$0xff]
        %v342 = vld [vmem:[%s295 + $0x140] sm:$0xff]
        %v343 = vld [vmem:[%s295 + $0x148] sm:$0xff]
        %v344 = vld [vmem:[%s295 + $0x150] sm:$0xff]
        %v345 = vld [vmem:[%s295 + $0x158] sm:$0xff]
        %v346 = vld [vmem:[%s295 + $0x160] sm:$0xff]
        %v347 = vld [vmem:[%s295 + $0x168] sm:$0xff]
        %v348 = vld [vmem:[%s295 + $0x170] sm:$0xff]
        %v349 = vld [vmem:[%s295 + $0x178] sm:$0xff]
        %v350 = vld [vmem:[%s295 + $0x180] sm:$0xff]
        %v351 = vld [vmem:[%s295 + $0x188] sm:$0xff]
        %v352 = vld [vmem:[%s295 + $0x190] sm:$0xff]
        %v353 = vld [vmem:[%s295 + $0x198] sm:$0xff]
        %v354 = vld [vmem:[%s295 + $0x1a0] sm:$0xff]
        %v355 = vld [vmem:[%s295 + $0x1a8] sm:$0xff]
        %v356 = vld [vmem:[%s295 + $0x1b0] sm:$0xff]
        %v357 = vld [vmem:[%s295 + $0x1b8] sm:$0xff]
        %v358 = vld [vmem:[%s295 + $0x1c0] sm:$0xff]
        %v359 = vld [vmem:[%s295 + $0x1c8] sm:$0xff]
        %v360 = vld [vmem:[%s295 + $0x1d0] sm:$0xff]
        %v361 = vld [vmem:[%s295 + $0x1d8] sm:$0xff]
        %v362 = vld [vmem:[%s295 + $0x1e0] sm:$0xff]
        %v363 = vld [vmem:[%s295 + $0x1e8] sm:$0xff]
        %v364 = vld [vmem:[%s295 + $0x1f0] sm:$0xff]
        %v365 = vld [vmem:[%s295 + $0x1f8] sm:$0xff]
        %v366 = vlaneseq
        %v367 = vshrl.u32 %v366, 7
        %v368 = vadd.s32 %v367, 8
        %v369 = vadd.s32 %v367, 16
        %v370 = vadd.s32 %v367, 24
        %v371 = vadd.s32 %v367, 32
        %v372 = vadd.s32 %v367, 40
        %v373 = vadd.s32 %v367, 48
        %v374 = vadd.s32 %v367, 56
        %v375 = vadd.s32 %v367, 64
        %v376 = vadd.s32 %v367, 72
        %v377 = vadd.s32 %v367, 80
        %v378 = vadd.s32 %v367, 88
        %v379 = vadd.s32 %v367, 96
        %v380 = vadd.s32 %v367, 104
        %v381 = vadd.s32 %v367, 112
        %v382 = vadd.s32 %v367, 120
        %v383 = vadd.s32 %v367, 128
        %v384 = vadd.s32 %v367, 136
        %v385 = vadd.s32 %v367, 144
        %v386 = vadd.s32 %v367, 152
        %v387 = vadd.s32 %v367, 160
        %v388 = vadd.s32 %v367, 168
        %v389 = vadd.s32 %v367, 176
        %v390 = vadd.s32 %v367, 184
        %v391 = vadd.s32 %v367, 192
        %v392 = vadd.s32 %v367, 200
        %v393 = vadd.s32 %v367, 208
        %v394 = vadd.s32 %v367, 216
        %v395 = vadd.s32 %v367, 224
        %v396 = vadd.s32 %v367, 232
        %v397 = vadd.s32 %v367, 240
        %v398 = vadd.s32 %v367, 248
        %v399 = vadd.s32 %v367, 256
        %v400 = vadd.s32 %v367, 264
        %v401 = vadd.s32 %v367, 272
        %v402 = vadd.s32 %v367, 280
        %v403 = vadd.s32 %v367, 288
        %v404 = vadd.s32 %v367, 296
        %v405 = vadd.s32 %v367, 304
        %v406 = vadd.s32 %v367, 312
        %v407 = vadd.s32 %v367, 320
        %v408 = vadd.s32 %v367, 328
        %v409 = vadd.s32 %v367, 336
        %v410 = vadd.s32 %v367, 344
        %v411 = vadd.s32 %v367, 352
        %v412 = vadd.s32 %v367, 360
        %v413 = vadd.s32 %v367, 368
        %v414 = vadd.s32 %v367, 376
        %v415 = vadd.s32 %v367, 384
        %v416 = vadd.s32 %v367, 392
        %v417 = vadd.s32 %v367, 400
        %v418 = vadd.s32 %v367, 408
        %v419 = vadd.s32 %v367, 416
        %v420 = vadd.s32 %v367, 424
        %v421 = vadd.s32 %v367, 432
        %v422 = vadd.s32 %v367, 440
        %v423 = vadd.s32 %v367, 448
        %v424 = vadd.s32 %v367, 456
        %v425 = vadd.s32 %v367, 464
        %v426 = vadd.s32 %v367, 472
        %v427 = vadd.s32 %v367, 480
        %v428 = vadd.s32 %v367, 488
        %v429 = vadd.s32 %v367, 496
        %v430 = vadd.s32 %v367, 504
        %s431 = smul.u32 %s23, 512
        %v432 = vstv %s431
        %v433 = vadd.s32 %v367, %v432
        %v434 = vadd.s32 %v368, %v432
        %v435 = vadd.s32 %v369, %v432
        %v436 = vadd.s32 %v370, %v432
        %v437 = vadd.s32 %v371, %v432
        %v438 = vadd.s32 %v372, %v432
        %v439 = vadd.s32 %v373, %v432
        %v440 = vadd.s32 %v374, %v432
        %v441 = vadd.s32 %v375, %v432
        %v442 = vadd.s32 %v376, %v432
        %v443 = vadd.s32 %v377, %v432
        %v444 = vadd.s32 %v378, %v432
        %v445 = vadd.s32 %v379, %v432
        %v446 = vadd.s32 %v380, %v432
        %v447 = vadd.s32 %v381, %v432
        %v448 = vadd.s32 %v382, %v432
        %v449 = vadd.s32 %v383, %v432
        %v450 = vadd.s32 %v384, %v432
        %v451 = vadd.s32 %v385, %v432
        %v452 = vadd.s32 %v386, %v432
        %v453 = vadd.s32 %v387, %v432
        %v454 = vadd.s32 %v388, %v432
        %v455 = vadd.s32 %v389, %v432
        %v456 = vadd.s32 %v390, %v432
        %v457 = vadd.s32 %v391, %v432
        %v458 = vadd.s32 %v392, %v432
        %v459 = vadd.s32 %v393, %v432
        %v460 = vadd.s32 %v394, %v432
        %v461 = vadd.s32 %v395, %v432
        %v462 = vadd.s32 %v396, %v432
        %v463 = vadd.s32 %v397, %v432
        %v464 = vadd.s32 %v398, %v432
        %v465 = vadd.s32 %v399, %v432
        %v466 = vadd.s32 %v400, %v432
        %v467 = vadd.s32 %v401, %v432
        %v468 = vadd.s32 %v402, %v432
        %v469 = vadd.s32 %v403, %v432
        %v470 = vadd.s32 %v404, %v432
        %v471 = vadd.s32 %v405, %v432
        %v472 = vadd.s32 %v406, %v432
        %v473 = vadd.s32 %v407, %v432
        %v474 = vadd.s32 %v408, %v432
        %v475 = vadd.s32 %v409, %v432
        %v476 = vadd.s32 %v410, %v432
        %v477 = vadd.s32 %v411, %v432
        %v478 = vadd.s32 %v412, %v432
        %v479 = vadd.s32 %v413, %v432
        %v480 = vadd.s32 %v414, %v432
        %v481 = vadd.s32 %v415, %v432
        %v482 = vadd.s32 %v416, %v432
        %v483 = vadd.s32 %v417, %v432
        %v484 = vadd.s32 %v418, %v432
        %v485 = vadd.s32 %v419, %v432
        %v486 = vadd.s32 %v420, %v432
        %v487 = vadd.s32 %v421, %v432
        %v488 = vadd.s32 %v422, %v432
        %v489 = vadd.s32 %v423, %v432
        %v490 = vadd.s32 %v424, %v432
        %v491 = vadd.s32 %v425, %v432
        %v492 = vadd.s32 %v426, %v432
        %v493 = vadd.s32 %v427, %v432
        %v494 = vadd.s32 %v428, %v432
        %v495 = vadd.s32 %v429, %v432
        %v496 = vadd.s32 %v430, %v432
        %vm497 = vcmp.lt.s32.totalorder %v433, 1000
        %vm498 = vcmp.lt.s32.totalorder %v434, 1000
        %vm499 = vcmp.lt.s32.totalorder %v435, 1000
        %vm500 = vcmp.lt.s32.totalorder %v436, 1000
        %vm501 = vcmp.lt.s32.totalorder %v437, 1000
        %vm502 = vcmp.lt.s32.totalorder %v438, 1000
        %vm503 = vcmp.lt.s32.totalorder %v439, 1000
        %vm504 = vcmp.lt.s32.totalorder %v440, 1000
        %vm505 = vcmp.lt.s32.totalorder %v441, 1000
        %vm506 = vcmp.lt.s32.totalorder %v442, 1000
        %vm507 = vcmp.lt.s32.totalorder %v443, 1000
        %vm508 = vcmp.lt.s32.totalorder %v444, 1000
        %vm509 = vcmp.lt.s32.totalorder %v445, 1000
        %vm510 = vcmp.lt.s32.totalorder %v446, 1000
        %vm511 = vcmp.lt.s32.totalorder %v447, 1000
        %vm512 = vcmp.lt.s32.totalorder %v448, 1000
        %vm513 = vcmp.lt.s32.totalorder %v449, 1000
        %vm514 = vcmp.lt.s32.totalorder %v450, 1000
        %vm515 = vcmp.lt.s32.totalorder %v451, 1000
        %vm516 = vcmp.lt.s32.totalorder %v452, 1000
        %vm517 = vcmp.lt.s32.totalorder %v453, 1000
        %vm518 = vcmp.lt.s32.totalorder %v454, 1000
        %vm519 = vcmp.lt.s32.totalorder %v455, 1000
        %vm520 = vcmp.lt.s32.totalorder %v456, 1000
        %vm521 = vcmp.lt.s32.totalorder %v457, 1000
        %vm522 = vcmp.lt.s32.totalorder %v458, 1000
        %vm523 = vcmp.lt.s32.totalorder %v459, 1000
        %vm524 = vcmp.lt.s32.totalorder %v460, 1000
        %vm525 = vcmp.lt.s32.totalorder %v461, 1000
        %vm526 = vcmp.lt.s32.totalorder %v462, 1000
        %vm527 = vcmp.lt.s32.totalorder %v463, 1000
        %vm528 = vcmp.lt.s32.totalorder %v464, 1000
        %vm529 = vcmp.lt.s32.totalorder %v465, 1000
        %vm530 = vcmp.lt.s32.totalorder %v466, 1000
        %vm531 = vcmp.lt.s32.totalorder %v467, 1000
        %vm532 = vcmp.lt.s32.totalorder %v468, 1000
        %vm533 = vcmp.lt.s32.totalorder %v469, 1000
        %vm534 = vcmp.lt.s32.totalorder %v470, 1000
        %vm535 = vcmp.lt.s32.totalorder %v471, 1000
        %vm536 = vcmp.lt.s32.totalorder %v472, 1000
        %vm537 = vcmp.lt.s32.totalorder %v473, 1000
        %vm538 = vcmp.lt.s32.totalorder %v474, 1000
        %vm539 = vcmp.lt.s32.totalorder %v475, 1000
        %vm540 = vcmp.lt.s32.totalorder %v476, 1000
        %vm541 = vcmp.lt.s32.totalorder %v477, 1000
        %vm542 = vcmp.lt.s32.totalorder %v478, 1000
        %vm543 = vcmp.lt.s32.totalorder %v479, 1000
        %vm544 = vcmp.lt.s32.totalorder %v480, 1000
        %vm545 = vcmp.lt.s32.totalorder %v481, 1000
        %vm546 = vcmp.lt.s32.totalorder %v482, 1000
        %vm547 = vcmp.lt.s32.totalorder %v483, 1000
        %vm548 = vcmp.lt.s32.totalorder %v484, 1000
        %vm549 = vcmp.lt.s32.totalorder %v485, 1000
        %vm550 = vcmp.lt.s32.totalorder %v486, 1000
        %vm551 = vcmp.lt.s32.totalorder %v487, 1000
        %vm552 = vcmp.lt.s32.totalorder %v488, 1000
        %vm553 = vcmp.lt.s32.totalorder %v489, 1000
        %vm554 = vcmp.lt.s32.totalorder %v490, 1000
        %vm555 = vcmp.lt.s32.totalorder %v491, 1000
        %vm556 = vcmp.lt.s32.totalorder %v492, 1000
        %vm557 = vcmp.lt.s32.totalorder %v493, 1000
        %vm558 = vcmp.lt.s32.totalorder %v494, 1000
        %vm559 = vcmp.lt.s32.totalorder %v495, 1000
        %vm560 = vcmp.lt.s32.totalorder %v496, 1000
        %v561 = vsel %vm497, %v302, 0.0
        %v562 = vsel %vm498, %v303, 0.0
        %v563 = vsel %vm499, %v304, 0.0
        %v564 = vsel %vm500, %v305, 0.0
        %v565 = vsel %vm501, %v306, 0.0
        %v566 = vsel %vm502, %v307, 0.0
        %v567 = vsel %vm503, %v308, 0.0
        %v568 = vsel %vm504, %v309, 0.0
        %v569 = vsel %vm505, %v310, 0.0
        %v570 = vsel %vm506, %v311, 0.0
        %v571 = vsel %vm507, %v312, 0.0
        %v572 = vsel %vm508, %v313, 0.0
        %v573 = vsel %vm509, %v314, 0.0
        %v574 = vsel %vm510, %v315, 0.0
        %v575 = vsel %vm511, %v316, 0.0
        %v576 = vsel %vm512, %v317, 0.0
        %v577 = vsel %vm513, %v318, 0.0
        %v578 = vsel %vm514, %v319, 0.0
        %v579 = vsel %vm515, %v320, 0.0
        %v580 = vsel %vm516, %v321, 0.0
        %v581 = vsel %vm517, %v322, 0.0
        %v582 = vsel %vm518, %v323, 0.0
        %v583 = vsel %vm519, %v324, 0.0
        %v584 = vsel %vm520, %v325, 0.0
        %v585 = vsel %vm521, %v326, 0.0
        %v586 = vsel %vm522, %v327, 0.0
        %v587 = vsel %vm523, %v328, 0.0
        %v588 = vsel %vm524, %v329, 0.0
        %v589 = vsel %vm525, %v330, 0.0
        %v590 = vsel %vm526, %v331, 0.0
        %v591 = vsel %vm527, %v332, 0.0
        %v592 = vsel %vm528, %v333, 0.0
        %v593 = vsel %vm529, %v334, 0.0
        %v594 = vsel %vm530, %v335, 0.0
        %v595 = vsel %vm531, %v336, 0.0
        %v596 = vsel %vm532, %v337, 0.0
        %v597 = vsel %vm533, %v338, 0.0
        %v598 = vsel %vm534, %v339, 0.0
        %v599 = vsel %vm535, %v340, 0.0
        %v600 = vsel %vm536, %v341, 0.0
        %v601 = vsel %vm537, %v342, 0.0
        %v602 = vsel %vm538, %v343, 0.0
        %v603 = vsel %vm539, %v344, 0.0
        %v604 = vsel %vm540, %v345, 0.0
        %v605 = vsel %vm541, %v346, 0.0
        %v606 = vsel %vm542, %v347, 0.0
        %v607 = vsel %vm543, %v348, 0.0
        %v608 = vsel %vm544, %v349, 0.0
        %v609 = vsel %vm545, %v350, 0.0
        %v610 = vsel %vm546, %v351, 0.0
        %v611 = vsel %vm547, %v352, 0.0
        %v612 = vsel %vm548, %v353, 0.0
        %v613 = vsel %vm549, %v354, 0.0
        %v614 = vsel %vm550, %v355, 0.0
        %v615 = vsel %vm551, %v356, 0.0
        %v616 = vsel %vm552, %v357, 0.0
        %v617 = vsel %vm553, %v358, 0.0
        %v618 = vsel %vm554, %v359, 0.0
        %v619 = vsel %vm555, %v360, 0.0
        %v620 = vsel %vm556, %v361, 0.0
        %v621 = vsel %vm557, %v362, 0.0
        %v622 = vsel %vm558, %v363, 0.0
        %v623 = vsel %vm559, %v364, 0.0
        %v624 = vsel %vm560, %v365, 0.0
        %v625 = vld [vmem:[%s1] sm:$0xff]
        %v626 = vld [vmem:[%s1 + $0x8] sm:$0xff]
        %v627 = vld [vmem:[%s1 + $0x10] sm:$0xff]
        %v628 = vld [vmem:[%s1 + $0x18] sm:$0xff]
        %v629 = vld [vmem:[%s1 + $0x20] sm:$0xff]
        %v630 = vld [vmem:[%s1 + $0x28] sm:$0xff]
        %v631 = vld [vmem:[%s1 + $0x30] sm:$0xff]
        %v632 = vld [vmem:[%s1 + $0x38] sm:$0xff]
        %v633 = vld [vmem:[%s4] sm:$0xff]
        %v634 = vld [vmem:[%s4 + $0x8] sm:$0xff]
        %v635 = vld [vmem:[%s4 + $0x10] sm:$0xff]
        %v636 = vld [vmem:[%s4 + $0x18] sm:$0xff]
        %v637 = vld [vmem:[%s4 + $0x20] sm:$0xff]
        %v638 = vld [vmem:[%s4 + $0x28] sm:$0xff]
        %v639 = vld [vmem:[%s4 + $0x30] sm:$0xff]
        %v640 = vld [vmem:[%s4 + $0x38] sm:$0xff]
        %642 = vset.pattern.permute.xlu0 0
        %643 = vperm.xlu0 %642, %v633
        %v644 = vpop.permute.xlu0 %643
        %647 = vset.pattern.permute.xlu0 0
        %648 = vperm.xlu0 %647, %v634
        %v649 = vpop.permute.xlu0 %648
        %652 = vset.pattern.permute.xlu0 0
        %653 = vperm.xlu0 %652, %v635
        %v654 = vpop.permute.xlu0 %653
        %657 = vset.pattern.permute.xlu0 0
        %658 = vperm.xlu0 %657, %v636
        %v659 = vpop.permute.xlu0 %658
        %662 = vset.pattern.permute.xlu0 0
        %663 = vperm.xlu0 %662, %v637
        %v664 = vpop.permute.xlu0 %663
        %667 = vset.pattern.permute.xlu0 0
        %668 = vperm.xlu0 %667, %v638
        %v669 = vpop.permute.xlu0 %668
        %672 = vset.pattern.permute.xlu0 0
        %673 = vperm.xlu0 %672, %v639
        %v674 = vpop.permute.xlu0 %673
        %677 = vset.pattern.permute.xlu0 0
        %678 = vperm.xlu0 %677, %v640
        %v679 = vpop.permute.xlu0 %678
        %vm681 = vcmask 130048
        %v683 = vsel %vm681, %v625, 0
        %v686 = vsel %vm681, %v626, 0
        %v689 = vsel %vm681, %v627, 0
        %v692 = vsel %vm681, %v628, 0
        %v695 = vsel %vm681, %v629, 0
        %v698 = vsel %vm681, %v630, 0
        %v701 = vsel %vm681, %v631, 0
        %v704 = vsel %vm681, %v632, 0
        %v707 = vsel %vm681, %v561, 0
        %v710 = vsel %vm681, %v562, 0
        %v713 = vsel %vm681, %v563, 0
        %v716 = vsel %vm681, %v564, 0
        %v719 = vsel %vm681, %v565, 0
        %v722 = vsel %vm681, %v566, 0
        %v725 = vsel %vm681, %v567, 0
        %v728 = vsel %vm681, %v568, 0
        %v731 = vsel %vm681, %v569, 0
        %v734 = vsel %vm681, %v570, 0
        %v737 = vsel %vm681, %v571, 0
        %v740 = vsel %vm681, %v572, 0
        %v743 = vsel %vm681, %v573, 0
        %v746 = vsel %vm681, %v574, 0
        %v749 = vsel %vm681, %v575, 0
        %v752 = vsel %vm681, %v576, 0
        %v755 = vsel %vm681, %v577, 0
        %v758 = vsel %vm681, %v578, 0
        %v761 = vsel %vm681, %v579, 0
        %v764 = vsel %vm681, %v580, 0
        %v767 = vsel %vm681, %v581, 0
        %v770 = vsel %vm681, %v582, 0
        %v773 = vsel %vm681, %v583, 0
        %v776 = vsel %vm681, %v584, 0
        %v779 = vsel %vm681, %v585, 0
        %v782 = vsel %vm681, %v586, 0
        %v785 = vsel %vm681, %v587, 0
        %v788 = vsel %vm681, %v588, 0
        %v791 = vsel %vm681, %v589, 0
        %v794 = vsel %vm681, %v590, 0
        %v797 = vsel %vm681, %v591, 0
        %v800 = vsel %vm681, %v592, 0
        %v803 = vsel %vm681, %v593, 0
        %v806 = vsel %vm681, %v594, 0
        %v809 = vsel %vm681, %v595, 0
        %v812 = vsel %vm681, %v596, 0
        %v815 = vsel %vm681, %v597, 0
        %v818 = vsel %vm681, %v598, 0
        %v821 = vsel %vm681, %v599, 0
        %v824 = vsel %vm681, %v600, 0
        %v827 = vsel %vm681, %v601, 0
        %v830 = vsel %vm681, %v602, 0
        %v833 = vsel %vm681, %v603, 0
        %v836 = vsel %vm681, %v604, 0
        %v839 = vsel %vm681, %v605, 0
        %v842 = vsel %vm681, %v606, 0
        %v845 = vsel %vm681, %v607, 0
        %v848 = vsel %vm681, %v608, 0
        %v851 = vsel %vm681, %v609, 0
        %v854 = vsel %vm681, %v610, 0
        %v857 = vsel %vm681, %v611, 0
        %v860 = vsel %vm681, %v612, 0
        %v863 = vsel %vm681, %v613, 0
        %v866 = vsel %vm681, %v614, 0
        %v869 = vsel %vm681, %v615, 0
        %v872 = vsel %vm681, %v616, 0
        %v875 = vsel %vm681, %v617, 0
        %v878 = vsel %vm681, %v618, 0
        %v881 = vsel %vm681, %v619, 0
        %v884 = vsel %vm681, %v620, 0
        %v887 = vsel %vm681, %v621, 0
        %v890 = vsel %vm681, %v622, 0
        %v893 = vsel %vm681, %v623, 0
        %v896 = vsel %vm681, %v624, 0
        %898 = vmatpush.xpose.msra.mxu0 %v752
        %899 = vmatpush.xpose.msra.mxu0 %v749
        %900 = vmatpush.xpose.msra.mxu0 %v746
        %901 = vmatpush.xpose.msra.mxu0 %v743
        %902 = vmatpush.xpose.msra.mxu0 %v740
        %903 = vmatpush.xpose.msra.mxu0 %v737
        %904 = vmatpush.xpose.msra.mxu0 %v734
        %905 = vmatpush.xpose.msra.mxu0 %v731
        %906 = vmatpush.xpose.msra.mxu0 %v728
        %907 = vmatpush.xpose.msra.mxu0 %v725
        %908 = vmatpush.xpose.msra.mxu0 %v722
        %909 = vmatpush.xpose.msra.mxu0 %v719
        %910 = vmatpush.xpose.msra.mxu0 %v716
        %911 = vmatpush.xpose.msra.mxu0 %v713
        %912 = vmatpush.xpose.msra.mxu0 %v710
        %913 = vmatpush.xpose.msra.mxu0 %v707
        %914 = vmatmul.f32.gmra.mxu0 %v683
        %v915 = vpop.f32.mrf.mxu0
        %v916 = vadd.f32 %v644, %v915
        %917 = vmatmul.f32.gmra.mxu0 %v686
        %v918 = vpop.f32.mrf.mxu0
        %v919 = vadd.f32 %v649, %v918
        %920 = vmatmul.f32.gmra.mxu0 %v689
        %v921 = vpop.f32.mrf.mxu0
        %v922 = vadd.f32 %v654, %v921
        %923 = vmatmul.f32.gmra.mxu0 %v692
        %v924 = vpop.f32.mrf.mxu0
        %v925 = vadd.f32 %v659, %v924
        %926 = vmatmul.f32.gmra.mxu0 %v695
        %v927 = vpop.f32.mrf.mxu0
        %v928 = vadd.f32 %v664, %v927
        %929 = vmatmul.f32.gmra.mxu0 %v698
        %v930 = vpop.f32.mrf.mxu0
        %v931 = vadd.f32 %v669, %v930
        %932 = vmatmul.f32.gmra.mxu0 %v701
        %v933 = vpop.f32.mrf.mxu0
        %v934 = vadd.f32 %v674, %v933
        %935 = vmatmul.f32.gmra.mxu0 %v704
        %v936 = vpop.f32.mrf.mxu0
        %v937 = vadd.f32 %v679, %v936
        %938 = vdwg.mxu0
        %939 = vmatpush.xpose.msra.mxu0 %v800
        %940 = vmatpush.xpose.msra.mxu0 %v797
        %941 = vmatpush.xpose.msra.mxu0 %v794
        %942 = vmatpush.xpose.msra.mxu0 %v791
        %943 = vmatpush.xpose.msra.mxu0 %v788
        %944 = vmatpush.xpose.msra.mxu0 %v785
        %945 = vmatpush.xpose.msra.mxu0 %v782
        %946 = vmatpush.xpose.msra.mxu0 %v779
        %947 = vmatpush.xpose.msra.mxu0 %v776
        %948 = vmatpush.xpose.msra.mxu0 %v773
        %949 = vmatpush.xpose.msra.mxu0 %v770
        %950 = vmatpush.xpose.msra.mxu0 %v767
        %951 = vmatpush.xpose.msra.mxu0 %v764
        %952 = vmatpush.xpose.msra.mxu0 %v761
        %953 = vmatpush.xpose.msra.mxu0 %v758
        %954 = vmatpush.xpose.msra.mxu0 %v755
        %955 = vmatmul.f32.gmra.mxu0 %v683
        %v956 = vpop.f32.mrf.mxu0
        %v957 = vadd.f32 %v644, %v956
        %958 = vmatmul.f32.gmra.mxu0 %v686
        %v959 = vpop.f32.mrf.mxu0
        %v960 = vadd.f32 %v649, %v959
        %961 = vmatmul.f32.gmra.mxu0 %v689
        %v962 = vpop.f32.mrf.mxu0
        %v963 = vadd.f32 %v654, %v962
        %964 = vmatmul.f32.gmra.mxu0 %v692
        %v965 = vpop.f32.mrf.mxu0
        %v966 = vadd.f32 %v659, %v965
        %967 = vmatmul.f32.gmra.mxu0 %v695
        %v968 = vpop.f32.mrf.mxu0
        %v969 = vadd.f32 %v664, %v968
        %970 = vmatmul.f32.gmra.mxu0 %v698
        %v971 = vpop.f32.mrf.mxu0
        %v972 = vadd.f32 %v669, %v971
        %973 = vmatmul.f32.gmra.mxu0 %v701
        %v974 = vpop.f32.mrf.mxu0
        %v975 = vadd.f32 %v674, %v974
        %976 = vmatmul.f32.gmra.mxu0 %v704
        %v977 = vpop.f32.mrf.mxu0
        %v978 = vadd.f32 %v679, %v977
        %979 = vdwg.mxu0
        %980 = vmatpush.xpose.msra.mxu0 %v848
        %981 = vmatpush.xpose.msra.mxu0 %v845
        %982 = vmatpush.xpose.msra.mxu0 %v842
        %983 = vmatpush.xpose.msra.mxu0 %v839
        %984 = vmatpush.xpose.msra.mxu0 %v836
        %985 = vmatpush.xpose.msra.mxu0 %v833
        %986 = vmatpush.xpose.msra.mxu0 %v830
        %987 = vmatpush.xpose.msra.mxu0 %v827
        %988 = vmatpush.xpose.msra.mxu0 %v824
        %989 = vmatpush.xpose.msra.mxu0 %v821
        %990 = vmatpush.xpose.msra.mxu0 %v818
        %991 = vmatpush.xpose.msra.mxu0 %v815
        %992 = vmatpush.xpose.msra.mxu0 %v812
        %993 = vmatpush.xpose.msra.mxu0 %v809
        %994 = vmatpush.xpose.msra.mxu0 %v806
        %995 = vmatpush.xpose.msra.mxu0 %v803
        %996 = vmatmul.f32.gmra.mxu0 %v683
        %v997 = vpop.f32.mrf.mxu0
        %v998 = vadd.f32 %v644, %v997
        %999 = vmatmul.f32.gmra.mxu0 %v686
        %v1000 = vpop.f32.mrf.mxu0
        %v1001 = vadd.f32 %v649, %v1000
        %1002 = vmatmul.f32.gmra.mxu0 %v689
        %v1003 = vpop.f32.mrf.mxu0
        %v1004 = vadd.f32 %v654, %v1003
        %1005 = vmatmul.f32.gmra.mxu0 %v692
        %v1006 = vpop.f32.mrf.mxu0
        %v1007 = vadd.f32 %v659, %v1006
        %1008 = vmatmul.f32.gmra.mxu0 %v695
        %v1009 = vpop.f32.mrf.mxu0
        %v1010 = vadd.f32 %v664, %v1009
        %1011 = vmatmul.f32.gmra.mxu0 %v698
        %v1012 = vpop.f32.mrf.mxu0
        %v1013 = vadd.f32 %v669, %v1012
        %1014 = vmatmul.f32.gmra.mxu0 %v701
        %v1015 = vpop.f32.mrf.mxu0
        %v1016 = vadd.f32 %v674, %v1015
        %1017 = vmatmul.f32.gmra.mxu0 %v704
        %v1018 = vpop.f32.mrf.mxu0
        %v1019 = vadd.f32 %v679, %v1018
        %1020 = vdwg.mxu0
        %1021 = vmatpush.xpose.msra.mxu0 %v896
        %1022 = vmatpush.xpose.msra.mxu0 %v893
        %1023 = vmatpush.xpose.msra.mxu0 %v890
        %1024 = vmatpush.xpose.msra.mxu0 %v887
        %1025 = vmatpush.xpose.msra.mxu0 %v884
        %1026 = vmatpush.xpose.msra.mxu0 %v881
        %1027 = vmatpush.xpose.msra.mxu0 %v878
        %1028 = vmatpush.xpose.msra.mxu0 %v875
        %1029 = vmatpush.xpose.msra.mxu0 %v872
        %1030 = vmatpush.xpose.msra.mxu0 %v869
        %1031 = vmatpush.xpose.msra.mxu0 %v866
        %1032 = vmatpush.xpose.msra.mxu0 %v863
        %1033 = vmatpush.xpose.msra.mxu0 %v860
        %1034 = vmatpush.xpose.msra.mxu0 %v857
        %1035 = vmatpush.xpose.msra.mxu0 %v854
        %1036 = vmatpush.xpose.msra.mxu0 %v851
        %1037 = vmatmul.f32.gmra.mxu0 %v683
        %v1038 = vpop.f32.mrf.mxu0
        %v1039 = vadd.f32 %v644, %v1038
        %1040 = vmatmul.f32.gmra.mxu0 %v686
        %v1041 = vpop.f32.mrf.mxu0
        %v1042 = vadd.f32 %v649, %v1041
        %1043 = vmatmul.f32.gmra.mxu0 %v689
        %v1044 = vpop.f32.mrf.mxu0
        %v1045 = vadd.f32 %v654, %v1044
        %1046 = vmatmul.f32.gmra.mxu0 %v692
        %v1047 = vpop.f32.mrf.mxu0
        %v1048 = vadd.f32 %v659, %v1047
        %1049 = vmatmul.f32.gmra.mxu0 %v695
        %v1050 = vpop.f32.mrf.mxu0
        %v1051 = vadd.f32 %v664, %v1050
        %1052 = vmatmul.f32.gmra.mxu0 %v698
        %v1053 = vpop.f32.mrf.mxu0
        %v1054 = vadd.f32 %v669, %v1053
        %1055 = vmatmul.f32.gmra.mxu0 %v701
        %v1056 = vpop.f32.mrf.mxu0
        %v1057 = vadd.f32 %v674, %v1056
        %1058 = vmatmul.f32.gmra.mxu0 %v704
        %v1059 = vpop.f32.mrf.mxu0
        %v1060 = vadd.f32 %v679, %v1059
        %1061 = vdwg.mxu0
        %v1062 = vtanh.pop %v916
        %v1063 = vtanh.pop %v957
        %v1064 = vtanh.pop %v998
        %v1065 = vtanh.pop %v1039
        %v1066 = vtanh.pop %v919
        %v1067 = vtanh.pop %v960
        %v1068 = vtanh.pop %v1001
        %v1069 = vtanh.pop %v1042
        %v1070 = vtanh.pop %v922
        %v1071 = vtanh.pop %v963
        %v1072 = vtanh.pop %v1004
        %v1073 = vtanh.pop %v1045
        %v1074 = vtanh.pop %v925
        %v1075 = vtanh.pop %v966
        %v1076 = vtanh.pop %v1007
        %v1077 = vtanh.pop %v1048
        %v1078 = vtanh.pop %v928
        %v1079 = vtanh.pop %v969
        %v1080 = vtanh.pop %v1010
        %v1081 = vtanh.pop %v1051
        %v1082 = vtanh.pop %v931
        %v1083 = vtanh.pop %v972
        %v1084 = vtanh.pop %v1013
        %v1085 = vtanh.pop %v1054
        %v1086 = vtanh.pop %v934
        %v1087 = vtanh.pop %v975
        %v1088 = vtanh.pop %v1016
        %v1089 = vtanh.pop %v1057
        %v1090 = vtanh.pop %v937
        %v1091 = vtanh.pop %v978
        %v1092 = vtanh.pop %v1019
        %v1093 = vtanh.pop %v1060
        %v1094 = vld [vmem:[%s2] sm:$0xff]
        %v1095 = vld [vmem:[%s2 + $0x8] sm:$0xff]
        %v1096 = vld [vmem:[%s2 + $0x10] sm:$0xff]
        %v1097 = vld [vmem:[%s2 + $0x18] sm:$0xff]
        %v1098 = vld [vmem:[%s2 + $0x20] sm:$0xff]
        %v1099 = vld [vmem:[%s2 + $0x28] sm:$0xff]
        %v1100 = vld [vmem:[%s2 + $0x30] sm:$0xff]
        %v1101 = vld [vmem:[%s2 + $0x38] sm:$0xff]
        %v1102 = vld [vmem:[%s5] sm:$0xff]
        %v1103 = vld [vmem:[%s5 + $0x8] sm:$0xff]
        %v1104 = vld [vmem:[%s5 + $0x10] sm:$0xff]
        %v1105 = vld [vmem:[%s5 + $0x18] sm:$0xff]
        %v1106 = vld [vmem:[%s5 + $0x20] sm:$0xff]
        %v1107 = vld [vmem:[%s5 + $0x28] sm:$0xff]
        %v1108 = vld [vmem:[%s5 + $0x30] sm:$0xff]
        %v1109 = vld [vmem:[%s5 + $0x38] sm:$0xff]
        %1111 = vset.pattern.permute.xlu0 0
        %1112 = vperm.xlu0 %1111, %v1102
        %v1113 = vpop.permute.xlu0 %1112
        %1116 = vset.pattern.permute.xlu0 0
        %1117 = vperm.xlu0 %1116, %v1103
        %v1118 = vpop.permute.xlu0 %1117
        %1121 = vset.pattern.permute.xlu0 0
        %1122 = vperm.xlu0 %1121, %v1104
        %v1123 = vpop.permute.xlu0 %1122
        %1126 = vset.pattern.permute.xlu0 0
        %1127 = vperm.xlu0 %1126, %v1105
        %v1128 = vpop.permute.xlu0 %1127
        %1131 = vset.pattern.permute.xlu0 0
        %1132 = vperm.xlu0 %1131, %v1106
        %v1133 = vpop.permute.xlu0 %1132
        %1136 = vset.pattern.permute.xlu0 0
        %1137 = vperm.xlu0 %1136, %v1107
        %v1138 = vpop.permute.xlu0 %1137
        %1141 = vset.pattern.permute.xlu0 0
        %1142 = vperm.xlu0 %1141, %v1108
        %v1143 = vpop.permute.xlu0 %1142
        %1146 = vset.pattern.permute.xlu0 0
        %1147 = vperm.xlu0 %1146, %v1109
        %v1148 = vpop.permute.xlu0 %1147
        %vm1150 = vcmask 523264
        %v1152 = vsel %vm1150, %v1094, 0
        %v1155 = vsel %vm1150, %v1095, 0
        %v1158 = vsel %vm1150, %v1096, 0
        %v1161 = vsel %vm1150, %v1097, 0
        %v1164 = vsel %vm1150, %v1098, 0
        %v1167 = vsel %vm1150, %v1099, 0
        %v1170 = vsel %vm1150, %v1100, 0
        %v1173 = vsel %vm1150, %v1101, 0
        %1175 = vmatpush.msra.mxu0 0.0
        %1176 = vmatpush.msra.mxu0 0.0
        %1177 = vmatpush.msra.mxu0 0.0
        %1178 = vmatpush.msra.mxu0 0.0
        %1179 = vmatpush.msra.mxu0 0.0
        %1180 = vmatpush.msra.mxu0 0.0
        %1181 = vmatpush.msra.mxu0 0.0
        %1182 = vmatpush.msra.mxu0 0.0
        %1183 = vmatpush.msra.mxu0 %v1090
        %1184 = vmatpush.msra.mxu0 %v1086
        %1185 = vmatpush.msra.mxu0 %v1082
        %1186 = vmatpush.msra.mxu0 %v1078
        %1187 = vmatpush.msra.mxu0 %v1074
        %1188 = vmatpush.msra.mxu0 %v1070
        %1189 = vmatpush.msra.mxu0 %v1066
        %1190 = vmatpush.msra.mxu0 %v1062
        %1191 = vmatmul.f32.gmra.mxu0 %v1152
        %v1192 = vpop.f32.mrf.mxu0
        %v1193 = vadd.f32 %v1113, %v1192
        %1194 = vmatmul.f32.gmra.mxu0 %v1155
        %v1195 = vpop.f32.mrf.mxu0
        %v1196 = vadd.f32 %v1118, %v1195
        %1197 = vmatmul.f32.gmra.mxu0 %v1158
        %v1198 = vpop.f32.mrf.mxu0
        %v1199 = vadd.f32 %v1123, %v1198
        %1200 = vmatmul.f32.gmra.mxu0 %v1161
        %v1201 = vpop.f32.mrf.mxu0
        %v1202 = vadd.f32 %v1128, %v1201
        %1203 = vmatmul.f32.gmra.mxu0 %v1164
        %v1204 = vpop.f32.mrf.mxu0
        %v1205 = vadd.f32 %v1133, %v1204
        %1206 = vmatmul.f32.gmra.mxu0 %v1167
        %v1207 = vpop.f32.mrf.mxu0
        %v1208 = vadd.f32 %v1138, %v1207
        %1209 = vmatmul.f32.gmra.mxu0 %v1170
        %v1210 = vpop.f32.mrf.mxu0
        %v1211 = vadd.f32 %v1143, %v1210
        %1212 = vmatmul.f32.gmra.mxu0 %v1173
        %v1213 = vpop.f32.mrf.mxu0
        %v1214 = vadd.f32 %v1148, %v1213
        %1215 = vdwg.mxu0
        %1216 = vmatpush.msra.mxu0 0.0
        %1217 = vmatpush.msra.mxu0 0.0
        %1218 = vmatpush.msra.mxu0 0.0
        %1219 = vmatpush.msra.mxu0 0.0
        %1220 = vmatpush.msra.mxu0 0.0
        %1221 = vmatpush.msra.mxu0 0.0
        %1222 = vmatpush.msra.mxu0 0.0
        %1223 = vmatpush.msra.mxu0 0.0
        %1224 = vmatpush.msra.mxu0 %v1091
        %1225 = vmatpush.msra.mxu0 %v1087
        %1226 = vmatpush.msra.mxu0 %v1083
        %1227 = vmatpush.msra.mxu0 %v1079
        %1228 = vmatpush.msra.mxu0 %v1075
        %1229 = vmatpush.msra.mxu0 %v1071
        %1230 = vmatpush.msra.mxu0 %v1067
        %1231 = vmatpush.msra.mxu0 %v1063
        %1232 = vmatmul.f32.gmra.mxu0 %v1152
        %v1233 = vpop.f32.mrf.mxu0
        %v1234 = vadd.f32 %v1113, %v1233
        %1235 = vmatmul.f32.gmra.mxu0 %v1155
        %v1236 = vpop.f32.mrf.mxu0
        %v1237 = vadd.f32 %v1118, %v1236
        %1238 = vmatmul.f32.gmra.mxu0 %v1158
        %v1239 = vpop.f32.mrf.mxu0
        %v1240 = vadd.f32 %v1123, %v1239
        %1241 = vmatmul.f32.gmra.mxu0 %v1161
        %v1242 = vpop.f32.mrf.mxu0
        %v1243 = vadd.f32 %v1128, %v1242
        %1244 = vmatmul.f32.gmra.mxu0 %v1164
        %v1245 = vpop.f32.mrf.mxu0
        %v1246 = vadd.f32 %v1133, %v1245
        %1247 = vmatmul.f32.gmra.mxu0 %v1167
        %v1248 = vpop.f32.mrf.mxu0
        %v1249 = vadd.f32 %v1138, %v1248
        %1250 = vmatmul.f32.gmra.mxu0 %v1170
        %v1251 = vpop.f32.mrf.mxu0
        %v1252 = vadd.f32 %v1143, %v1251
        %1253 = vmatmul.f32.gmra.mxu0 %v1173
        %v1254 = vpop.f32.mrf.mxu0
        %v1255 = vadd.f32 %v1148, %v1254
        %1256 = vdwg.mxu0
        %1257 = vmatpush.msra.mxu0 0.0
        %1258 = vmatpush.msra.mxu0 0.0
        %1259 = vmatpush.msra.mxu0 0.0
        %1260 = vmatpush.msra.mxu0 0.0
        %1261 = vmatpush.msra.mxu0 0.0
        %1262 = vmatpush.msra.mxu0 0.0
        %1263 = vmatpush.msra.mxu0 0.0
        %1264 = vmatpush.msra.mxu0 0.0
        %1265 = vmatpush.msra.mxu0 %v1092
        %1266 = vmatpush.msra.mxu0 %v1088
        %1267 = vmatpush.msra.mxu0 %v1084
        %1268 = vmatpush.msra.mxu0 %v1080
        %1269 = vmatpush.msra.mxu0 %v1076
        %1270 = vmatpush.msra.mxu0 %v1072
        %1271 = vmatpush.msra.mxu0 %v1068
        %1272 = vmatpush.msra.mxu0 %v1064
        %1273 = vmatmul.f32.gmra.mxu0 %v1152
        %v1274 = vpop.f32.mrf.mxu0
        %v1275 = vadd.f32 %v1113, %v1274
        %1276 = vmatmul.f32.gmra.mxu0 %v1155
        %v1277 = vpop.f32.mrf.mxu0
        %v1278 = vadd.f32 %v1118, %v1277
        %1279 = vmatmul.f32.gmra.mxu0 %v1158
        %v1280 = vpop.f32.mrf.mxu0
        %v1281 = vadd.f32 %v1123, %v1280
        %1282 = vmatmul.f32.gmra.mxu0 %v1161
        %v1283 = vpop.f32.mrf.mxu0
        %v1284 = vadd.f32 %v1128, %v1283
        %1285 = vmatmul.f32.gmra.mxu0 %v1164
        %v1286 = vpop.f32.mrf.mxu0
        %v1287 = vadd.f32 %v1133, %v1286
        %1288 = vmatmul.f32.gmra.mxu0 %v1167
        %v1289 = vpop.f32.mrf.mxu0
        %v1290 = vadd.f32 %v1138, %v1289
        %1291 = vmatmul.f32.gmra.mxu0 %v1170
        %v1292 = vpop.f32.mrf.mxu0
        %v1293 = vadd.f32 %v1143, %v1292
        %1294 = vmatmul.f32.gmra.mxu0 %v1173
        %v1295 = vpop.f32.mrf.mxu0
        %v1296 = vadd.f32 %v1148, %v1295
        %1297 = vdwg.mxu0
        %1298 = vmatpush.msra.mxu0 0.0
        %1299 = vmatpush.msra.mxu0 0.0
        %1300 = vmatpush.msra.mxu0 0.0
        %1301 = vmatpush.msra.mxu0 0.0
        %1302 = vmatpush.msra.mxu0 0.0
        %1303 = vmatpush.msra.mxu0 0.0
        %1304 = vmatpush.msra.mxu0 0.0
        %1305 = vmatpush.msra.mxu0 0.0
        %1306 = vmatpush.msra.mxu0 %v1093
        %1307 = vmatpush.msra.mxu0 %v1089
        %1308 = vmatpush.msra.mxu0 %v1085
        %1309 = vmatpush.msra.mxu0 %v1081
        %1310 = vmatpush.msra.mxu0 %v1077
        %1311 = vmatpush.msra.mxu0 %v1073
        %1312 = vmatpush.msra.mxu0 %v1069
        %1313 = vmatpush.msra.mxu0 %v1065
        %1314 = vmatmul.f32.gmra.mxu0 %v1152
        %v1315 = vpop.f32.mrf.mxu0
        %v1316 = vadd.f32 %v1113, %v1315
        %1317 = vmatmul.f32.gmra.mxu0 %v1155
        %v1318 = vpop.f32.mrf.mxu0
        %v1319 = vadd.f32 %v1118, %v1318
        %1320 = vmatmul.f32.gmra.mxu0 %v1158
        %v1321 = vpop.f32.mrf.mxu0
        %v1322 = vadd.f32 %v1123, %v1321
        %1323 = vmatmul.f32.gmra.mxu0 %v1161
        %v1324 = vpop.f32.mrf.mxu0
        %v1325 = vadd.f32 %v1128, %v1324
        %1326 = vmatmul.f32.gmra.mxu0 %v1164
        %v1327 = vpop.f32.mrf.mxu0
        %v1328 = vadd.f32 %v1133, %v1327
        %1329 = vmatmul.f32.gmra.mxu0 %v1167
        %v1330 = vpop.f32.mrf.mxu0
        %v1331 = vadd.f32 %v1138, %v1330
        %1332 = vmatmul.f32.gmra.mxu0 %v1170
        %v1333 = vpop.f32.mrf.mxu0
        %v1334 = vadd.f32 %v1143, %v1333
        %1335 = vmatmul.f32.gmra.mxu0 %v1173
        %v1336 = vpop.f32.mrf.mxu0
        %v1337 = vadd.f32 %v1148, %v1336
        %1338 = vdwg.mxu0
        %v1339 = vtanh.pop %v1193
        %v1340 = vtanh.pop %v1234
        %v1341 = vtanh.pop %v1275
        %v1342 = vtanh.pop %v1316
        %v1343 = vtanh.pop %v1196
        %v1344 = vtanh.pop %v1237
        %v1345 = vtanh.pop %v1278
        %v1346 = vtanh.pop %v1319
        %v1347 = vtanh.pop %v1199
        %v1348 = vtanh.pop %v1240
        %v1349 = vtanh.pop %v1281
        %v1350 = vtanh.pop %v1322
        %v1351 = vtanh.pop %v1202
        %v1352 = vtanh.pop %v1243
        %v1353 = vtanh.pop %v1284
        %v1354 = vtanh.pop %v1325
        %v1355 = vtanh.pop %v1205
        %v1356 = vtanh.pop %v1246
        %v1357 = vtanh.pop %v1287
        %v1358 = vtanh.pop %v1328
        %v1359 = vtanh.pop %v1208
        %v1360 = vtanh.pop %v1249
        %v1361 = vtanh.pop %v1290
        %v1362 = vtanh.pop %v1331
        %v1363 = vtanh.pop %v1211
        %v1364 = vtanh.pop %v1252
        %v1365 = vtanh.pop %v1293
        %v1366 = vtanh.pop %v1334
        %v1367 = vtanh.pop %v1214
        %v1368 = vtanh.pop %v1255
        %v1369 = vtanh.pop %v1296
        %v1370 = vtanh.pop %v1337
        %v1371 = vld [vmem:[%s3] sm:$0x1]
        %v1372 = vld [vmem:[#allocation2] sm:$0x1]
        %1374 = vset.pattern.permute.xlu0 0
        %1375 = vperm.xlu0 %1374, %v1372
        %v1376 = vpop.permute.xlu0 %1375
        %v1378 = vperm.slane %v1376, 0
        %v1380 = vsel %vm1150, %v1371, 0
        %1382 = vmatpush.msra.mxu0 0.0
        %1383 = vmatpush.msra.mxu0 0.0
        %1384 = vmatpush.msra.mxu0 0.0
        %1385 = vmatpush.msra.mxu0 0.0
        %1386 = vmatpush.msra.mxu0 0.0
        %1387 = vmatpush.msra.mxu0 0.0
        %1388 = vmatpush.msra.mxu0 0.0
        %1389 = vmatpush.msra.mxu0 0.0
        %1390 = vmatpush.msra.mxu0 %v1367
        %1391 = vmatpush.msra.mxu0 %v1363
        %1392 = vmatpush.msra.mxu0 %v1359
        %1393 = vmatpush.msra.mxu0 %v1355
        %1394 = vmatpush.msra.mxu0 %v1351
        %1395 = vmatpush.msra.mxu0 %v1347
        %1396 = vmatpush.msra.mxu0 %v1343
        %1397 = vmatpush.msra.mxu0 %v1339
        %1398 = vmatmul.f32.gmra.mxu0 %v1380
        %v1399 = vpop.f32.mrf.mxu0
        %v1400 = vadd.f32 %v1378, %v1399
        %1401 = vdwg.mxu0
        %1402 = vmatpush.msra.mxu0 0.0
        %1403 = vmatpush.msra.mxu0 0.0
        %1404 = vmatpush.msra.mxu0 0.0
        %1405 = vmatpush.msra.mxu0 0.0
        %1406 = vmatpush.msra.mxu0 0.0
        %1407 = vmatpush.msra.mxu0 0.0
        %1408 = vmatpush.msra.mxu0 0.0
        %1409 = vmatpush.msra.mxu0 0.0
        %1410 = vmatpush.msra.mxu0 %v1368
        %1411 = vmatpush.msra.mxu0 %v1364
        %1412 = vmatpush.msra.mxu0 %v1360
        %1413 = vmatpush.msra.mxu0 %v1356
        %1414 = vmatpush.msra.mxu0 %v1352
        %1415 = vmatpush.msra.mxu0 %v1348
        %1416 = vmatpush.msra.mxu0 %v1344
        %1417 = vmatpush.msra.mxu0 %v1340
        %1418 = vmatmul.f32.gmra.mxu0 %v1380
        %v1419 = vpop.f32.mrf.mxu0
        %v1420 = vadd.f32 %v1378, %v1419
        %1421 = vdwg.mxu0
        %1422 = vmatpush.msra.mxu0 0.0
        %1423 = vmatpush.msra.mxu0 0.0
        %1424 = vmatpush.msra.mxu0 0.0
        %1425 = vmatpush.msra.mxu0 0.0
        %1426 = vmatpush.msra.mxu0 0.0
        %1427 = vmatpush.msra.mxu0 0.0
        %1428 = vmatpush.msra.mxu0 0.0
        %1429 = vmatpush.msra.mxu0 0.0
        %1430 = vmatpush.msra.mxu0 %v1369
        %1431 = vmatpush.msra.mxu0 %v1365
        %1432 = vmatpush.msra.mxu0 %v1361
        %1433 = vmatpush.msra.mxu0 %v1357
        %1434 = vmatpush.msra.mxu0 %v1353
        %1435 = vmatpush.msra.mxu0 %v1349
        %1436 = vmatpush.msra.mxu0 %v1345
        %1437 = vmatpush.msra.mxu0 %v1341
        %1438 = vmatmul.f32.gmra.mxu0 %v1380
        %v1439 = vpop.f32.mrf.mxu0
        %v1440 = vadd.f32 %v1378, %v1439
        %1441 = vdwg.mxu0
        %1442 = vmatpush.msra.mxu0 0.0
        %1443 = vmatpush.msra.mxu0 0.0
        %1444 = vmatpush.msra.mxu0 0.0
        %1445 = vmatpush.msra.mxu0 0.0
        %1446 = vmatpush.msra.mxu0 0.0
        %1447 = vmatpush.msra.mxu0 0.0
        %1448 = vmatpush.msra.mxu0 0.0
        %1449 = vmatpush.msra.mxu0 0.0
        %1450 = vmatpush.msra.mxu0 %v1370
        %1451 = vmatpush.msra.mxu0 %v1366
        %1452 = vmatpush.msra.mxu0 %v1362
        %1453 = vmatpush.msra.mxu0 %v1358
        %1454 = vmatpush.msra.mxu0 %v1354
        %1455 = vmatpush.msra.mxu0 %v1350
        %1456 = vmatpush.msra.mxu0 %v1346
        %1457 = vmatpush.msra.mxu0 %v1342
        %1458 = vmatmul.f32.gmra.mxu0 %v1380
        %v1459 = vpop.f32.mrf.mxu0
        %v1460 = vadd.f32 %v1378, %v1459
        %1461 = vdwg.mxu0
        %v1466 = vrot.slane %v1420, 7
        %v1467 = vrot.slane %v1440, 6
        %v1468 = vrot.slane %v1460, 5
        %vm1469 = vcmask 1040384
        %v1470 = vsel %vm1469, %v1400, %v1466
        %vm1471 = vcmask 1042434
        %v1472 = vsel %vm1471, %v1467, %v1468
        %vm1473 = vcmask 1041408
        %v1474 = vsel %vm1473, %v1470, %v1472
        %v1476 = vlaneseq
        %vm1477 = vcmp.ge.s32.totalorder %v1476, 0
        %vm1478 = vcmp.lt.s32.totalorder %v1476, 512
        %vm1479 = vmand %vm1477, %vm1478
        %1480 = vst.msk [vmem:[%s286] sm:$0xf] %vm1479, %v1474
        %s1481 = sand.u32 %s183, 1
        %s1482 = scalar_lea.sflag [#allocation4], %s1481
        %s1483 = sand.u32 %s183, 1
        %s1484 = smul.addr %s1483, 4
        %s1485 = scalar_lea.vmem [#allocation3], %s1484
        // Predicated region
        $region49: #{mlp_critic_forward.1} parent=47 // pred_check
          %p1486 = pneg %p193
        $region50: #{mlp_critic_forward.1} parent=47 // pred_check_branch
          %1488 = sbr.rel (%p1486) target = $region52
        $region51: #{mlp_critic_forward.1} parent=47 // pred_region
          %s1489 = smul.u32 4, %s23
          %1491 = vsyncadd %s1482, 0
          %s1492 = scalar_lea.hbm %s7, %s1489
          %s1494 = sshll.u32 %s1485, 4
          %s1495 = int_to_ptr.vmem [resolvable:$true] %s1494
          %s1496 = sshll.u32 %s1492, 4
          %s1497 = int_to_ptr.hbm [resolvable:$true] %s1496
          %1499 = dma.vmem_to_hbm [thread:$0]  %s1495, 64, %s1497, %s1482
        $region52: #{mlp_critic_forward.1} parent=47 // pred_fallthru
          _
      $region48: #{mlp_critic_forward.1} parent=5 // pred_fallthru
        _
      %p1500 = scmp.le.s32.totalorder 2, %s18
      // Predicated region
      $region53: #{mlp_critic_forward.1} parent=5 // pred_check
        %p1501 = pneg %p1500
      $region54: #{mlp_critic_forward.1} parent=5 // pred_check_branch
        %1503 = sbr.rel (%p1501) target = $region56
      $region55: #{mlp_critic_forward.1} parent=5 // pred_region
        %s1504 = ssub.s32 %s18, 2
        // Predicated region
        $region57: #{mlp_critic_forward.1} parent=55 // pred_check
          %p1505 = pneg %p199
        $region58: #{mlp_critic_forward.1} parent=55 // pred_check_branch
          %1507 = sbr.rel (%p1505) target = $region60
        $region59: #{mlp_critic_forward.1} parent=55 // pred_region
          %s1508 = sand.u32 %s184, 1
          %s1509 = scalar_lea.sflag [#allocation4], %s1508
          %s1510 = sand.u32 %s184, 1
          %s1511 = smul.addr %s1510, 4
          %s1512 = scalar_lea.vmem [#allocation3], %s1511
          %1514 = dma.done %s1509, 64
        $region60: #{mlp_critic_forward.1} parent=55 // pred_fallthru
          _
      $region56: #{mlp_critic_forward.1} parent=5 // pred_fallthru
        _
    $region6: #{mlp_critic_forward.1} parent=1 // loop_footer
      %s22 = sadd.s32 1, %s18
    $region7: #{mlp_critic_forward.1} parent=1 // loop_footer_branch
      %17 = sbr.rel target = $region3
    $region8: #{mlp_critic_forward.1} parent=1 // loop_exit
      _
    %1515 = vsyncpa [#allocation4], 1
    %s1516 = scalar_lea.sflag [#allocation4], 1
    %1517 = vsyncpa %s1516, 1

</llo_original>
